<compile_context>
chip_gen: v7x
topology: tpu7x:2x2x1
jax: 0.10.0
libtpu: 0.0.40
codegen_flags: <defaults>
</compile_context>

<pallas_src>
import jax
import jax.numpy as jnp
from jax.experimental import pallas as pl
from jax.experimental.pallas import tpu as pltpu


def _mlp_kernel(xt_ref, w1_ref, b1_ref, w2_ref, b2_ref, o_ref):
    # xt_ref: (C_in, tm)   lane-dense streamed operand
    # w1_ref: (H, C_in), b1_ref: (H, 1), w2_ref: (1, H), b2_ref: (1, 1)
    # o_ref : (1, tm)      lane-dense output slab
    h = jnp.dot(w1_ref[...], xt_ref[...], preferred_element_type=jnp.float32)  # (H, tm)
    # TODO(synk): nn.Dropout is identity at inference; training-mode dropout
    # (with pltpu.prng_random_bits) is not implemented here.
    h = jnp.maximum(h + b1_ref[...], 0.0)  # bias broadcast over lanes + ReLU

    y = jnp.dot(w2_ref[...], h, preferred_element_type=jnp.float32)  # (1, tm)
    o_ref[...] = jnp.maximum(y + b2_ref[...], 0.0).astype(o_ref.dtype)


def critical_node_predictor(x, edge_index, params, *, tm_cap=8192):
    """Forward pass. `edge_index` is accepted (API parity) but unused, exactly
    as in the PyTorch module's forward."""
    del edge_index
    w1, b1, w2, b2 = params  # w1: [H, C_in], b1: [H, 1], w2: [1, H], b2: [1, 1]
    n, c_in = x.shape
    hidden = w1.shape[0]

    # ---- lane-dense layout plumbing (no compute) ----------------------------
    # N goes on the lane axis; in a production graph the producer would already
    # emit the feature-major [C_in, N] layout, here we transpose at the boundary.
    n_lane = pl.cdiv(n, 128) * 128          # lane alignment
    tm = min(n_lane, tm_cap)                # big tile; multiple of 128
    n_pad = pl.cdiv(n_lane, tm) * tm        # pad N to a multiple of the tile
    xt = jnp.pad(x.T, ((0, 0), (0, n_pad - n)))   # [C_in, n_pad]

    grid = (n_pad // tm,)

    cost = pl.CostEstimate(
        flops=2 * n_pad * c_in * hidden + 2 * n_pad * hidden,
        transcendentals=0,
        bytes_accessed=4 * (c_in * n_pad + n_pad
                            + hidden * c_in + hidden + hidden + 1),
    )

    out = pl.pallas_call(
        _mlp_kernel,
        out_shape=jax.ShapeDtypeStruct((1, n_pad), x.dtype),
        grid_spec=pltpu.PrefetchScalarGridSpec(
            num_scalar_prefetch=0,
            grid=grid,
            in_specs=[
                pl.BlockSpec((c_in, tm), lambda i: (0, i)),       # xT (streamed)
                pl.BlockSpec((hidden, c_in), lambda i: (0, 0)),   # W1 (resident)
                pl.BlockSpec((hidden, 1), lambda i: (0, 0)),      # b1
                pl.BlockSpec((1, hidden), lambda i: (0, 0)),      # W2
                pl.BlockSpec((1, 1), lambda i: (0, 0)),           # b2
            ],
            out_specs=pl.BlockSpec((1, tm), lambda i: (0, i)),
        ),
        compiler_params=pltpu.CompilerParams(
            # Parallel grid axis -> shards across v7x's 2 TensorCores when the
            # grid has >= 2 steps (bandwidth-bound kernel, each TC has its own
            # HBM path).
            dimension_semantics=("parallel",),
        ),
        cost_estimate=cost,
    )(xt, w1, b1, w2, b2)

    # squeeze(1) of the PyTorch module == drop the size-1 axis and strip padding.
    return out[0, :n]


def init_params(key, in_channels, hidden_channels, out_channels=1):
    """Deterministic init mimicking torch.nn.Linear defaults:
    U(-1/sqrt(fan_in), 1/sqrt(fan_in)) for both weight and bias.
    Weights stored in the kernel's transposed layout:
      w1: [H, C_in], b1: [H, 1], w2: [out, H], b2: [out, 1]."""
    k1, k2, k3, k4 = jax.random.split(key, 4)
    bound1 = 1.0 / jnp.sqrt(in_channels)
    bound2 = 1.0 / jnp.sqrt(hidden_channels)
    w1 = jax.random.uniform(k1, (hidden_channels, in_channels),
                            minval=-bound1, maxval=bound1, dtype=jnp.float32)
    b1 = jax.random.uniform(k2, (hidden_channels, 1),
                            minval=-bound1, maxval=bound1, dtype=jnp.float32)
    w2 = jax.random.uniform(k3, (out_channels, hidden_channels),
                            minval=-bound2, maxval=bound2, dtype=jnp.float32)
    b2 = jax.random.uniform(k4, (out_channels, 1),
                            minval=-bound2, maxval=bound2, dtype=jnp.float32)
    return w1, b1, w2, b2


def _reference(x, params):
    w1, b1, w2, b2 = params
    h = jnp.maximum(x @ w1.T + b1[:, 0], 0.0)
    y = jnp.maximum(h @ w2.T + b2[:, 0], 0.0)
    return y[:, 0]


if __name__ == "__main__":
    key = jax.random.PRNGKey(0)
    k_x, k_p, k_e = jax.random.split(key, 3)

    N = 777            # number of nodes (deliberately NOT a multiple of 128)
    IN_CHANNELS = 16   # input feature dim
    HIDDEN = 32        # hidden_channels
    OUT_CHANNELS = 1   # out_channels (default)

    x = jax.random.normal(k_x, (N, IN_CHANNELS), dtype=jnp.float32)
    # edge_index is unused by the forward pass but kept for API parity.
    edge_index = jax.random.randint(k_e, (2, 64), 0, N, dtype=jnp.int32)

    params = init_params(k_p, IN_CHANNELS, HIDDEN, OUT_CHANNELS)

    out = critical_node_predictor(x, edge_index, params)
    out = jax.block_until_ready(out)

    ref = _reference(x, params)
    assert out.shape == (N,), out.shape
    assert jnp.allclose(out, ref, atol=1e-5, rtol=1e-5), float(
        jnp.max(jnp.abs(out - ref)))

    print("KERNEL_OK")
</pallas_src>

<mosaic_0001>
module attributes {stable_mosaic.version = 11 : i64} {
  func.func @_mlp_kernel(%arg0: i32, %arg1: memref<16x896xf32, #tpu.memory_space<vmem>>, %arg2: memref<32x16xf32, #tpu.memory_space<vmem>>, %arg3: memref<32x1xf32, #tpu.memory_space<vmem>>, %arg4: memref<1x32xf32, #tpu.memory_space<vmem>>, %arg5: memref<1x1xf32, #tpu.memory_space<vmem>>, %arg6: memref<1x896xf32, #tpu.memory_space<vmem>>) attributes {dimension_semantics = [#tpu.dimension_semantics<parallel>], iteration_bounds = array<i64: 1>, scalar_prefetch = 0 : i64, scratch_operands = 0 : i64, tpu.core_type = #tpu.core_type<tc>, window_params = [{transform_indices = @transform_0, window_bounds = array<i64: 16, 896>}, {pipeline_mode = #tpu.pipeline_mode<synchronous>, transform_indices = @transform_1, window_bounds = array<i64: 32, 16>}, {pipeline_mode = #tpu.pipeline_mode<synchronous>, transform_indices = @transform_2, window_bounds = array<i64: 32, 1>}, {pipeline_mode = #tpu.pipeline_mode<synchronous>, transform_indices = @transform_3, window_bounds = array<i64: 1, 32>}, {pipeline_mode = #tpu.pipeline_mode<synchronous>, transform_indices = @transform_4, window_bounds = array<i64: 1, 1>}, {transform_indices = @transform_5, window_bounds = array<i64: 1, 896>}]} {
    %c0 = arith.constant 0 : index
    %c0_0 = arith.constant 0 : index
    %0 = vector.load %arg2[%c0, %c0_0] : memref<32x16xf32, #tpu.memory_space<vmem>>, vector<32x16xf32>
    %c0_1 = arith.constant 0 : index
    %c0_2 = arith.constant 0 : index
    %1 = vector.load %arg1[%c0_1, %c0_2] : memref<16x896xf32, #tpu.memory_space<vmem>>, vector<16x896xf32>
    %cst = arith.constant dense<0.000000e+00> : vector<32x896xf32>
    %2 = tpu.matmul %0, %1, %cst {dimension_numbers = #tpu.dot_dimension_numbers<[1], [0], [0], [1], [0, 0, 1, 1], [], []>} : vector<32x16xf32>, vector<16x896xf32>, vector<32x896xf32> -> vector<32x896xf32>
    %c0_3 = arith.constant 0 : index
    %c0_4 = arith.constant 0 : index
    %3 = vector.load %arg3[%c0_3, %c0_4] : memref<32x1xf32, #tpu.memory_space<vmem>>, vector<32x1xf32>
    %4 = vector.broadcast %3 : vector<32x1xf32> to vector<32x896xf32>
    %5 = arith.addf %2, %4 : vector<32x896xf32>
    %cst_5 = arith.constant 0.000000e+00 : f32
    %6 = vector.broadcast %cst_5 : f32 to vector<32x896xf32>
    %7 = arith.maximumf %5, %6 : vector<32x896xf32>
    %c0_6 = arith.constant 0 : index
    %c0_7 = arith.constant 0 : index
    %8 = vector.load %arg4[%c0_6, %c0_7] : memref<1x32xf32, #tpu.memory_space<vmem>>, vector<1x32xf32>
    %cst_8 = arith.constant dense<0.000000e+00> : vector<1x896xf32>
    %9 = tpu.matmul %8, %7, %cst_8 {dimension_numbers = #tpu.dot_dimension_numbers<[1], [0], [0], [1], [0, 0, 1, 1], [], []>} : vector<1x32xf32>, vector<32x896xf32>, vector<1x896xf32> -> vector<1x896xf32>
    %c0_9 = arith.constant 0 : index
    %c0_10 = arith.constant 0 : index
    %10 = vector.load %arg5[%c0_9, %c0_10] : memref<1x1xf32, #tpu.memory_space<vmem>>, vector<1x1xf32>
    %11 = vector.broadcast %10 : vector<1x1xf32> to vector<1x896xf32>
    %12 = arith.addf %9, %11 : vector<1x896xf32>
    %cst_11 = arith.constant 0.000000e+00 : f32
    %13 = vector.broadcast %cst_11 : f32 to vector<1x896xf32>
    %14 = arith.maximumf %12, %13 : vector<1x896xf32>
    %c0_12 = arith.constant 0 : index
    %c0_13 = arith.constant 0 : index
    %15 = vector.load %arg6[%c0_12, %c0_13] : memref<1x896xf32, #tpu.memory_space<vmem>>, vector<1x896xf32>
    tpu.vector_store %arg6[%c0_12, %c0_13], %14 {strides = array<i32>} : memref<1x896xf32, #tpu.memory_space<vmem>>, vector<1x896xf32>,
    return
  }
  func.func @transform_0(%arg0: i32) -> (i32, i32) {
    %c0_i32 = arith.constant 0 : i32
    %c0_i32_0 = arith.constant 0 : i32
    return %c0_i32, %arg0 : i32, i32
  }
  func.func @transform_1(%arg0: i32) -> (i32, i32) {
    %c0_i32 = arith.constant 0 : i32
    %c0_i32_0 = arith.constant 0 : i32
    %c0_i32_1 = arith.constant 0 : i32
    return %c0_i32, %c0_i32_0 : i32, i32
  }
  func.func @transform_2(%arg0: i32) -> (i32, i32) {
    %c0_i32 = arith.constant 0 : i32
    %c0_i32_0 = arith.constant 0 : i32
    %c0_i32_1 = arith.constant 0 : i32
    return %c0_i32, %c0_i32_0 : i32, i32
  }
  func.func @transform_3(%arg0: i32) -> (i32, i32) {
    %c0_i32 = arith.constant 0 : i32
    %c0_i32_0 = arith.constant 0 : i32
    %c0_i32_1 = arith.constant 0 : i32
    return %c0_i32, %c0_i32_0 : i32, i32
  }
  func.func @transform_4(%arg0: i32) -> (i32, i32) {
    %c0_i32 = arith.constant 0 : i32
    %c0_i32_0 = arith.constant 0 : i32
    %c0_i32_1 = arith.constant 0 : i32
    return %c0_i32, %c0_i32_0 : i32, i32
  }
  func.func @transform_5(%arg0: i32) -> (i32, i32) {
    %c0_i32 = arith.constant 0 : i32
    %c0_i32_0 = arith.constant 0 : i32
    return %c0_i32, %arg0 : i32, i32
  }
}

</mosaic_0001>

<llo_original>
// kernel: tpu_custom_call.1
$region0: #{tpu_custom_call.1}
  #allocation0 [shape = 'u32[]', space=smem, size = 0x4, offset = 0x4, fixed_abs, tag = 'smem constant byte address 0x4 - core index']
  #allocation1 [shape = 'u32[144,128]{1,0:T(1,128)}', space=vmem, size = 0x12000, scoped, tag = 'internal scratch']
  #allocation2 [shape = 'f32[1,1]{1,0:T(1,128)S(1)}', space=vmem, size = 0x200, scoped, tag = 'scoped memory for tpu_custom_call.1']
  %s0 = inlined_call_operand.hbm [shape: f32[16,896], index: 0, kind: input, shape index: {}]
  %s1 = inlined_call_operand.vmem [shape: f32[32,16], index: 1, kind: input, shape index: {}]
  %s2 = inlined_call_operand.vmem [shape: f32[32,1], index: 2, kind: input, shape index: {}]
  %s3 = inlined_call_operand.vmem [shape: f32[1,32], index: 3, kind: input, shape index: {}]
  %s4 = inlined_call_operand.<no memory space> [shape: f32[1,1], index: 4, kind: input, shape index: {}]
  %s5 = inlined_call_operand.hbm [shape: f32[1,896], index: 5, kind: output, shape index: {}]
  %s6 = sld [smem:[#allocation0]]
  $region34: #{tpu_custom_call.1} parent=0
    _
  %s8 = ssub.s32 1, %s6
  %s9 = scalar_select 0, %s8, %s6
  %v10 = vstv %s4
  %11 = vst [vmem:[#allocation2] sm:$0x1] %v10
  $region1: #{tpu_custom_call.1} parent=0
    #allocation3 [shape = 'u8[57344]{0}', space=vmem, size = 0xe000, scoped, tag = 'input window, operand 0, single buffered']
    #allocation4 [shape = 's32[1]{0}', space=sflag, size = 0x4, scoped, tag = 'scoped memory for tpu_custom_call.1']
    #allocation5 [shape = 's32[1]{0}', space=sflag, size = 0x4, scoped, tag = 'scoped memory for tpu_custom_call.1']
    #allocation6 [shape = 'u8[3584]{0}', space=vmem, size = 0x1000, scoped, tag = 'output window, operand 0, single buffered']
    %12 = vsyncpa [#allocation4], 0
    %13 = vsyncpa [#allocation5], 0
    // Predicated region
    $region2: #{tpu_custom_call.1} parent=1 // pred_check
      _
    $region3: #{tpu_custom_call.1} parent=1 // pred_check_branch
      %15 = sbr.rel (0) target = $region5
    $region4: #{tpu_custom_call.1} parent=1 // pred_region
      %s17 = ssub.s32 1792, 1792
      %18 = vsyncadd [#allocation4], %s17
      %s19 = sshll.u32 [#allocation3], 4
      %s20 = int_to_ptr.vmem [resolvable:$true] %s19
      %25 = dma.hbm_to_vmem [thread:$0]  %s0, 1792, %s20, [#allocation4], 896, 896, 56
    $region5: #{tpu_custom_call.1} parent=1 // pred_fallthru
      _
    // Predicated region
    $region6: #{tpu_custom_call.1} parent=1 // pred_check
      _
    $region7: #{tpu_custom_call.1} parent=1 // pred_check_branch
      %27 = sbr.rel (0) target = $region9
    $region8: #{tpu_custom_call.1} parent=1 // pred_region
      _
    $region9: #{tpu_custom_call.1} parent=1 // pred_fallthru
      _
    // Predicated region
    $region10: #{tpu_custom_call.1} parent=1 // pred_check
      _
    $region11: #{tpu_custom_call.1} parent=1 // pred_check_branch
      %29 = sbr.rel (0) target = $region13
    $region12: #{tpu_custom_call.1} parent=1 // pred_region
      _
    $region13: #{tpu_custom_call.1} parent=1 // pred_fallthru
      _
    // Predicated region
    $region14: #{tpu_custom_call.1} parent=1 // pred_check
      _
    $region15: #{tpu_custom_call.1} parent=1 // pred_check_branch
      %31 = sbr.rel (0) target = $region17
    $region16: #{tpu_custom_call.1} parent=1 // pred_region
      _
    $region17: #{tpu_custom_call.1} parent=1 // pred_fallthru
      _
    // Predicated region
    $region18: #{tpu_custom_call.1} parent=1 // pred_check
      _
    $region19: #{tpu_custom_call.1} parent=1 // pred_check_branch
      %33 = sbr.rel (0) target = $region21
    $region20: #{tpu_custom_call.1} parent=1 // pred_region
      _
    $region21: #{tpu_custom_call.1} parent=1 // pred_fallthru
      _
    // Predicated region
    $region22: #{tpu_custom_call.1} parent=1 // pred_check
      _
    $region23: #{tpu_custom_call.1} parent=1 // pred_check_branch
      %35 = sbr.rel (0) target = $region25
    $region24: #{tpu_custom_call.1} parent=1 // pred_region
      %36 = dma.done [#allocation4], 1792
    $region25: #{tpu_custom_call.1} parent=1 // pred_fallthru
      _
    %v37 = vld [vmem:[%s1] sm:$0xff]
    %v38 = vld [vmem:[%s1 + $0x8] sm:$0xff]
    %v39 = vld [vmem:[%s1 + $0x10] sm:$0xff]
    %v40 = vld [vmem:[%s1 + $0x18] sm:$0xff]
    %v41 = vld [vmem:[#allocation3] sm:$0xff]
    %v42 = vld [vmem:[#allocation3 + $0x8] sm:$0xff]
    %v43 = vld [vmem:[#allocation3 + $0x10] sm:$0xff]
    %v44 = vld [vmem:[#allocation3 + $0x18] sm:$0xff]
    %v45 = vld [vmem:[#allocation3 + $0x20] sm:$0xff]
    %v46 = vld [vmem:[#allocation3 + $0x28] sm:$0xff]
    %v47 = vld [vmem:[#allocation3 + $0x30] sm:$0xff]
    %v48 = vld [vmem:[#allocation3 + $0x38] sm:$0xff]
    %v49 = vld [vmem:[#allocation3 + $0x40] sm:$0xff]
    %v50 = vld [vmem:[#allocation3 + $0x48] sm:$0xff]
    %v51 = vld [vmem:[#allocation3 + $0x50] sm:$0xff]
    %v52 = vld [vmem:[#allocation3 + $0x58] sm:$0xff]
    %v53 = vld [vmem:[#allocation3 + $0x60] sm:$0xff]
    %v54 = vld [vmem:[#allocation3 + $0x68] sm:$0xff]
    %v55 = vld [vmem:[%s2] sm:$0xff]
    %v56 = vld [vmem:[%s2 + $0x8] sm:$0xff]
    %v57 = vld [vmem:[%s2 + $0x10] sm:$0xff]
    %v58 = vld [vmem:[%s2 + $0x18] sm:$0xff]
    %60 = vset.pattern.permute.xlu0 0
    %61 = vperm.xlu0 %60, %v55
    %v62 = vpop.permute.xlu0 %61
    %65 = vset.pattern.permute.xlu0 0
    %66 = vperm.xlu0 %65, %v56
    %v67 = vpop.permute.xlu0 %66
    %70 = vset.pattern.permute.xlu0 0
    %71 = vperm.xlu0 %70, %v57
    %v72 = vpop.permute.xlu0 %71
    %75 = vset.pattern.permute.xlu0 0
    %76 = vperm.xlu0 %75, %v58
    %v77 = vpop.permute.xlu0 %76
    %vm79 = vcmask 130048
    %v81 = vsel %vm79, %v37, 0
    %v84 = vsel %vm79, %v38, 0
    %v87 = vsel %vm79, %v39, 0
    %v90 = vsel %vm79, %v40, 0
    %92 = vmatprep.subr.mxu0 %v42
    %93 = vmatpush1.msra.mxu0 %v41
    %94 = vmatprep.subr.mxu0 %v49
    %95 = vmatpush1.msra.mxu0 %v48
    %96 = vmatprep.subr.mxu0 0.0
    %97 = vmatpush1.msra.mxu0 0.0
    %98 = vmatprep.subr.mxu0 0.0
    %99 = vmatpush1.msra.mxu0 0.0
    %100 = vmatprep.subr.mxu0 0.0
    %101 = vmatpush1.msra.mxu0 0.0
    %102 = vmatprep.subr.mxu0 0.0
    %103 = vmatpush1.msra.mxu0 0.0
    %104 = vmatprep.subr.mxu0 0.0
    %105 = vmatpush1.msra.mxu0 0.0
    %106 = vmatprep.subr.mxu0 0.0
    %107 = vmatpush1.msra.mxu0 0.0
    %108 = vmatprep.subr.mxu0 0.0
    %109 = vmatpush1.msra.mxu0 0.0
    %110 = vmatprep.subr.mxu0 0.0
    %111 = vmatpush1.msra.mxu0 0.0
    %112 = vmatprep.subr.mxu0 0.0
    %113 = vmatpush1.msra.mxu0 0.0
    %114 = vmatprep.subr.mxu0 0.0
    %115 = vmatpush1.msra.mxu0 0.0
    %116 = vmatprep.subr.mxu0 0.0
    %117 = vmatpush1.msra.mxu0 0.0
    %118 = vmatprep.subr.mxu0 0.0
    %119 = vmatpush1.msra.mxu0 0.0
    %120 = vmatprep.subr.mxu0 0.0
    %121 = vmatpush1.msra.mxu0 0.0
    %122 = vmatprep.subr.mxu0 0.0
    %123 = vmatpush1.msra.mxu0 0.0
    %124 = vmatprep.subr.mxu0 0.0
    %125 = vmatpush1.msra.mxu0 0.0
    %126 = vmatprep.subr.mxu0 0.0
    %127 = vmatpush1.msra.mxu0 0.0
    %128 = vmatprep.subr.mxu0 0.0
    %129 = vmatpush1.msra.mxu0 0.0
    %130 = vmatprep.subr.mxu0 0.0
    %131 = vmatpush1.msra.mxu0 0.0
    %132 = vmatprep.subr.mxu0 0.0
    %133 = vmatpush1.msra.mxu0 0.0
    %134 = vmatprep.subr.mxu0 0.0
    %135 = vmatpush1.msra.mxu0 0.0
    %136 = vmatprep.subr.mxu0 0.0
    %137 = vmatpush1.msra.mxu0 0.0
    %138 = vmatprep.subr.mxu0 0.0
    %139 = vmatpush1.msra.mxu0 0.0
    %140 = vmatprep.subr.mxu0 0.0
    %141 = vmatpush1.msra.mxu0 0.0
    %142 = vmatprep.subr.mxu0 0.0
    %143 = vmatpush1.msra.mxu0 0.0
    %144 = vmatprep.subr.mxu0 0.0
    %145 = vmatpush1.msra.mxu0 0.0
    %146 = vmatprep.subr.mxu0 0.0
    %147 = vmatpush1.msra.mxu0 0.0
    %148 = vmatprep.subr.mxu0 0.0
    %149 = vmatpush1.msra.mxu0 0.0
    %150 = vmatprep.subr.mxu0 0.0
    %151 = vmatpush1.msra.mxu0 0.0
    %152 = vmatprep.subr.mxu0 0.0
    %153 = vmatpush1.msra.mxu0 0.0
    %154 = vmatprep.subr.mxu0 0.0
    %155 = vmatpush1.msra.mxu0 0.0
    %156 = vmatprep.mubr.f32.mxu0 0.0
    %157 = vmatmul.mubr.f32.gmra.mrb[0].mxu0 %v81
    %v158 = vpop.f32.mrb[0].mxu0
    %v159 = vadd.f32 %v62, %v158
    %v160 = vpop.f32.mrb[0].mxu0
    %v161 = vadd.f32 %v62, %v160
    %162 = vmatprep.mubr.f32.mxu0 0.0
    %163 = vmatmul.mubr.f32.gmra.mrb[0].mxu0 %v84
    %v164 = vpop.f32.mrb[0].mxu0
    %v165 = vadd.f32 %v67, %v164
    %v166 = vpop.f32.mrb[0].mxu0
    %v167 = vadd.f32 %v67, %v166
    %168 = vmatprep.mubr.f32.mxu0 0.0
    %169 = vmatmul.mubr.f32.gmra.mrb[0].mxu0 %v87
    %v170 = vpop.f32.mrb[0].mxu0
    %v171 = vadd.f32 %v72, %v170
    %v172 = vpop.f32.mrb[0].mxu0
    %v173 = vadd.f32 %v72, %v172
    %174 = vmatprep.mubr.f32.mxu0 0.0
    %175 = vmatmul.mubr.f32.gmra.mrb[0].mxu0 %v90
    %v176 = vpop.f32.mrb[0].mxu0
    %v177 = vadd.f32 %v77, %v176
    %v178 = vpop.f32.mrb[0].mxu0
    %v179 = vadd.f32 %v77, %v178
    %180 = vdwg.mxu0
    %181 = vmatprep.subr.mxu0 %v44
    %182 = vmatpush1.msra.mxu0 %v43
    %183 = vmatprep.subr.mxu0 %v51
    %184 = vmatpush1.msra.mxu0 %v50
    %185 = vmatprep.subr.mxu0 0.0
    %186 = vmatpush1.msra.mxu0 0.0
    %187 = vmatprep.subr.mxu0 0.0
    %188 = vmatpush1.msra.mxu0 0.0
    %189 = vmatprep.subr.mxu0 0.0
    %190 = vmatpush1.msra.mxu0 0.0
    %191 = vmatprep.subr.mxu0 0.0
    %192 = vmatpush1.msra.mxu0 0.0
    %193 = vmatprep.subr.mxu0 0.0
    %194 = vmatpush1.msra.mxu0 0.0
    %195 = vmatprep.subr.mxu0 0.0
    %196 = vmatpush1.msra.mxu0 0.0
    %197 = vmatprep.subr.mxu0 0.0
    %198 = vmatpush1.msra.mxu0 0.0
    %199 = vmatprep.subr.mxu0 0.0
    %200 = vmatpush1.msra.mxu0 0.0
    %201 = vmatprep.subr.mxu0 0.0
    %202 = vmatpush1.msra.mxu0 0.0
    %203 = vmatprep.subr.mxu0 0.0
    %204 = vmatpush1.msra.mxu0 0.0
    %205 = vmatprep.subr.mxu0 0.0
    %206 = vmatpush1.msra.mxu0 0.0
    %207 = vmatprep.subr.mxu0 0.0
    %208 = vmatpush1.msra.mxu0 0.0
    %209 = vmatprep.subr.mxu0 0.0
    %210 = vmatpush1.msra.mxu0 0.0
    %211 = vmatprep.subr.mxu0 0.0
    %212 = vmatpush1.msra.mxu0 0.0
    %213 = vmatprep.subr.mxu0 0.0
    %214 = vmatpush1.msra.mxu0 0.0
    %215 = vmatprep.subr.mxu0 0.0
    %216 = vmatpush1.msra.mxu0 0.0
    %217 = vmatprep.subr.mxu0 0.0
    %218 = vmatpush1.msra.mxu0 0.0
    %219 = vmatprep.subr.mxu0 0.0
    %220 = vmatpush1.msra.mxu0 0.0
    %221 = vmatprep.subr.mxu0 0.0
    %222 = vmatpush1.msra.mxu0 0.0
    %223 = vmatprep.subr.mxu0 0.0
    %224 = vmatpush1.msra.mxu0 0.0
    %225 = vmatprep.subr.mxu0 0.0
    %226 = vmatpush1.msra.mxu0 0.0
    %227 = vmatprep.subr.mxu0 0.0
    %228 = vmatpush1.msra.mxu0 0.0
    %229 = vmatprep.subr.mxu0 0.0
    %230 = vmatpush1.msra.mxu0 0.0
    %231 = vmatprep.subr.mxu0 0.0
    %232 = vmatpush1.msra.mxu0 0.0
    %233 = vmatprep.subr.mxu0 0.0
    %234 = vmatpush1.msra.mxu0 0.0
    %235 = vmatprep.subr.mxu0 0.0
    %236 = vmatpush1.msra.mxu0 0.0
    %237 = vmatprep.subr.mxu0 0.0
    %238 = vmatpush1.msra.mxu0 0.0
    %239 = vmatprep.subr.mxu0 0.0
    %240 = vmatpush1.msra.mxu0 0.0
    %241 = vmatprep.subr.mxu0 0.0
    %242 = vmatpush1.msra.mxu0 0.0
    %243 = vmatprep.subr.mxu0 0.0
    %244 = vmatpush1.msra.mxu0 0.0
    %245 = vmatprep.mubr.f32.mxu0 0.0
    %246 = vmatmul.mubr.f32.gmra.mrb[0].mxu0 %v81
    %v247 = vpop.f32.mrb[0].mxu0
    %v248 = vadd.f32 %v62, %v247
    %v249 = vpop.f32.mrb[0].mxu0
    %v250 = vadd.f32 %v62, %v249
    %251 = vmatprep.mubr.f32.mxu0 0.0
    %252 = vmatmul.mubr.f32.gmra.mrb[0].mxu0 %v84
    %v253 = vpop.f32.mrb[0].mxu0
    %v254 = vadd.f32 %v67, %v253
    %v255 = vpop.f32.mrb[0].mxu0
    %v256 = vadd.f32 %v67, %v255
    %257 = vmatprep.mubr.f32.mxu0 0.0
    %258 = vmatmul.mubr.f32.gmra.mrb[0].mxu0 %v87
    %v259 = vpop.f32.mrb[0].mxu0
    %v260 = vadd.f32 %v72, %v259
    %v261 = vpop.f32.mrb[0].mxu0
    %v262 = vadd.f32 %v72, %v261
    %263 = vmatprep.mubr.f32.mxu0 0.0
    %264 = vmatmul.mubr.f32.gmra.mrb[0].mxu0 %v90
    %v265 = vpop.f32.mrb[0].mxu0
    %v266 = vadd.f32 %v77, %v265
    %v267 = vpop.f32.mrb[0].mxu0
    %v268 = vadd.f32 %v77, %v267
    %269 = vdwg.mxu0
    %270 = vmatprep.subr.mxu0 %v46
    %271 = vmatpush1.msra.mxu0 %v45
    %272 = vmatprep.subr.mxu0 %v53
    %273 = vmatpush1.msra.mxu0 %v52
    %274 = vmatprep.subr.mxu0 0.0
    %275 = vmatpush1.msra.mxu0 0.0
    %276 = vmatprep.subr.mxu0 0.0
    %277 = vmatpush1.msra.mxu0 0.0
    %278 = vmatprep.subr.mxu0 0.0
    %279 = vmatpush1.msra.mxu0 0.0
    %280 = vmatprep.subr.mxu0 0.0
    %281 = vmatpush1.msra.mxu0 0.0
    %282 = vmatprep.subr.mxu0 0.0
    %283 = vmatpush1.msra.mxu0 0.0
    %284 = vmatprep.subr.mxu0 0.0
    %285 = vmatpush1.msra.mxu0 0.0
    %286 = vmatprep.subr.mxu0 0.0
    %287 = vmatpush1.msra.mxu0 0.0
    %288 = vmatprep.subr.mxu0 0.0
    %289 = vmatpush1.msra.mxu0 0.0
    %290 = vmatprep.subr.mxu0 0.0
    %291 = vmatpush1.msra.mxu0 0.0
    %292 = vmatprep.subr.mxu0 0.0
    %293 = vmatpush1.msra.mxu0 0.0
    %294 = vmatprep.subr.mxu0 0.0
    %295 = vmatpush1.msra.mxu0 0.0
    %296 = vmatprep.subr.mxu0 0.0
    %297 = vmatpush1.msra.mxu0 0.0
    %298 = vmatprep.subr.mxu0 0.0
    %299 = vmatpush1.msra.mxu0 0.0
    %300 = vmatprep.subr.mxu0 0.0
    %301 = vmatpush1.msra.mxu0 0.0
    %302 = vmatprep.subr.mxu0 0.0
    %303 = vmatpush1.msra.mxu0 0.0
    %304 = vmatprep.subr.mxu0 0.0
    %305 = vmatpush1.msra.mxu0 0.0
    %306 = vmatprep.subr.mxu0 0.0
    %307 = vmatpush1.msra.mxu0 0.0
    %308 = vmatprep.subr.mxu0 0.0
    %309 = vmatpush1.msra.mxu0 0.0
    %310 = vmatprep.subr.mxu0 0.0
    %311 = vmatpush1.msra.mxu0 0.0
    %312 = vmatprep.subr.mxu0 0.0
    %313 = vmatpush1.msra.mxu0 0.0
    %314 = vmatprep.subr.mxu0 0.0
    %315 = vmatpush1.msra.mxu0 0.0
    %316 = vmatprep.subr.mxu0 0.0
    %317 = vmatpush1.msra.mxu0 0.0
    %318 = vmatprep.subr.mxu0 0.0
    %319 = vmatpush1.msra.mxu0 0.0
    %320 = vmatprep.subr.mxu0 0.0
    %321 = vmatpush1.msra.mxu0 0.0
    %322 = vmatprep.subr.mxu0 0.0
    %323 = vmatpush1.msra.mxu0 0.0
    %324 = vmatprep.subr.mxu0 0.0
    %325 = vmatpush1.msra.mxu0 0.0
    %326 = vmatprep.subr.mxu0 0.0
    %327 = vmatpush1.msra.mxu0 0.0
    %328 = vmatprep.subr.mxu0 0.0
    %329 = vmatpush1.msra.mxu0 0.0
    %330 = vmatprep.subr.mxu0 0.0
    %331 = vmatpush1.msra.mxu0 0.0
    %332 = vmatprep.subr.mxu0 0.0
    %333 = vmatpush1.msra.mxu0 0.0
    %334 = vmatprep.mubr.f32.mxu0 0.0
    %335 = vmatmul.mubr.f32.gmra.mrb[0].mxu0 %v81
    %v336 = vpop.f32.mrb[0].mxu0
    %v337 = vadd.f32 %v62, %v336
    %v338 = vpop.f32.mrb[0].mxu0
    %v339 = vadd.f32 %v62, %v338
    %340 = vmatprep.mubr.f32.mxu0 0.0
    %341 = vmatmul.mubr.f32.gmra.mrb[0].mxu0 %v84
    %v342 = vpop.f32.mrb[0].mxu0
    %v343 = vadd.f32 %v67, %v342
    %v344 = vpop.f32.mrb[0].mxu0
    %v345 = vadd.f32 %v67, %v344
    %346 = vmatprep.mubr.f32.mxu0 0.0
    %347 = vmatmul.mubr.f32.gmra.mrb[0].mxu0 %v87
    %v348 = vpop.f32.mrb[0].mxu0
    %v349 = vadd.f32 %v72, %v348
    %v350 = vpop.f32.mrb[0].mxu0
    %v351 = vadd.f32 %v72, %v350
    %352 = vmatprep.mubr.f32.mxu0 0.0
    %353 = vmatmul.mubr.f32.gmra.mrb[0].mxu0 %v90
    %v354 = vpop.f32.mrb[0].mxu0
    %v355 = vadd.f32 %v77, %v354
    %v356 = vpop.f32.mrb[0].mxu0
    %v357 = vadd.f32 %v77, %v356
    %358 = vdwg.mxu0
    %359 = vmatprep.subr.mxu0 0.0
    %360 = vmatpush1.msra.mxu0 %v47
    %361 = vmatprep.subr.mxu0 0.0
    %362 = vmatpush1.msra.mxu0 %v54
    %363 = vmatprep.subr.mxu0 0.0
    %364 = vmatpush1.msra.mxu0 0.0
    %365 = vmatprep.subr.mxu0 0.0
    %366 = vmatpush1.msra.mxu0 0.0
    %367 = vmatprep.subr.mxu0 0.0
    %368 = vmatpush1.msra.mxu0 0.0
    %369 = vmatprep.subr.mxu0 0.0
    %370 = vmatpush1.msra.mxu0 0.0
    %371 = vmatprep.subr.mxu0 0.0
    %372 = vmatpush1.msra.mxu0 0.0
    %373 = vmatprep.subr.mxu0 0.0
    %374 = vmatpush1.msra.mxu0 0.0
    %375 = vmatprep.subr.mxu0 0.0
    %376 = vmatpush1.msra.mxu0 0.0
    %377 = vmatprep.subr.mxu0 0.0
    %378 = vmatpush1.msra.mxu0 0.0
    %379 = vmatprep.subr.mxu0 0.0
    %380 = vmatpush1.msra.mxu0 0.0
    %381 = vmatprep.subr.mxu0 0.0
    %382 = vmatpush1.msra.mxu0 0.0
    %383 = vmatprep.subr.mxu0 0.0
    %384 = vmatpush1.msra.mxu0 0.0
    %385 = vmatprep.subr.mxu0 0.0
    %386 = vmatpush1.msra.mxu0 0.0
    %387 = vmatprep.subr.mxu0 0.0
    %388 = vmatpush1.msra.mxu0 0.0
    %389 = vmatprep.subr.mxu0 0.0
    %390 = vmatpush1.msra.mxu0 0.0
    %391 = vmatprep.subr.mxu0 0.0
    %392 = vmatpush1.msra.mxu0 0.0
    %393 = vmatprep.subr.mxu0 0.0
    %394 = vmatpush1.msra.mxu0 0.0
    %395 = vmatprep.subr.mxu0 0.0
    %396 = vmatpush1.msra.mxu0 0.0
    %397 = vmatprep.subr.mxu0 0.0
    %398 = vmatpush1.msra.mxu0 0.0
    %399 = vmatprep.subr.mxu0 0.0
    %400 = vmatpush1.msra.mxu0 0.0
    %401 = vmatprep.subr.mxu0 0.0
    %402 = vmatpush1.msra.mxu0 0.0
    %403 = vmatprep.subr.mxu0 0.0
    %404 = vmatpush1.msra.mxu0 0.0
    %405 = vmatprep.subr.mxu0 0.0
    %406 = vmatpush1.msra.mxu0 0.0
    %407 = vmatprep.subr.mxu0 0.0
    %408 = vmatpush1.msra.mxu0 0.0
    %409 = vmatprep.subr.mxu0 0.0
    %410 = vmatpush1.msra.mxu0 0.0
    %411 = vmatprep.subr.mxu0 0.0
    %412 = vmatpush1.msra.mxu0 0.0
    %413 = vmatprep.subr.mxu0 0.0
    %414 = vmatpush1.msra.mxu0 0.0
    %415 = vmatprep.subr.mxu0 0.0
    %416 = vmatpush1.msra.mxu0 0.0
    %417 = vmatprep.subr.mxu0 0.0
    %418 = vmatpush1.msra.mxu0 0.0
    %419 = vmatprep.subr.mxu0 0.0
    %420 = vmatpush1.msra.mxu0 0.0
    %421 = vmatprep.subr.mxu0 0.0
    %422 = vmatpush1.msra.mxu0 0.0
    %423 = vmatprep.mubr.f32.mxu0 0.0
    %424 = vmatmul.mubr.f32.gmra.mrb[0].mxu0 %v81
    %v425 = vpop.f32.mrb[0].mxu0
    %v426 = vadd.f32 %v62, %v425
    %v427 = vpop.f32.mrb[0].mxu0
    %428 = vmatprep.mubr.f32.mxu0 0.0
    %429 = vmatmul.mubr.f32.gmra.mrb[0].mxu0 %v84
    %v430 = vpop.f32.mrb[0].mxu0
    %v431 = vadd.f32 %v67, %v430
    %v432 = vpop.f32.mrb[0].mxu0
    %433 = vmatprep.mubr.f32.mxu0 0.0
    %434 = vmatmul.mubr.f32.gmra.mrb[0].mxu0 %v87
    %v435 = vpop.f32.mrb[0].mxu0
    %v436 = vadd.f32 %v72, %v435
    %v437 = vpop.f32.mrb[0].mxu0
    %438 = vmatprep.mubr.f32.mxu0 0.0
    %439 = vmatmul.mubr.f32.gmra.mrb[0].mxu0 %v90
    %v440 = vpop.f32.mrb[0].mxu0
    %v441 = vadd.f32 %v77, %v440
    %v442 = vpop.f32.mrb[0].mxu0
    %443 = vdwg.mxu0
    %v444 = vmax.f32 %v159, 0.0
    %v445 = vmax.f32 %v161, 0.0
    %v446 = vmax.f32 %v248, 0.0
    %v447 = vmax.f32 %v250, 0.0
    %v448 = vmax.f32 %v337, 0.0
    %v449 = vmax.f32 %v339, 0.0
    %v450 = vmax.f32 %v426, 0.0
    %v451 = vmax.f32 %v165, 0.0
    %v452 = vmax.f32 %v167, 0.0
    %v453 = vmax.f32 %v254, 0.0
    %v454 = vmax.f32 %v256, 0.0
    %v455 = vmax.f32 %v343, 0.0
    %v456 = vmax.f32 %v345, 0.0
    %v457 = vmax.f32 %v431, 0.0
    %v458 = vmax.f32 %v171, 0.0
    %v459 = vmax.f32 %v173, 0.0
    %v460 = vmax.f32 %v260, 0.0
    %v461 = vmax.f32 %v262, 0.0
    %v462 = vmax.f32 %v349, 0.0
    %v463 = vmax.f32 %v351, 0.0
    %v464 = vmax.f32 %v436, 0.0
    %v465 = vmax.f32 %v177, 0.0
    %v466 = vmax.f32 %v179, 0.0
    %v467 = vmax.f32 %v266, 0.0
    %v468 = vmax.f32 %v268, 0.0
    %v469 = vmax.f32 %v355, 0.0
    %v470 = vmax.f32 %v357, 0.0
    %v471 = vmax.f32 %v441, 0.0
    %v472 = vld [vmem:[%s3] sm:$0x1]
    %v473 = vld [vmem:[#allocation2] sm:$0x1]
    %475 = vset.pattern.permute.xlu0 0
    %476 = vperm.xlu0 %475, %v473
    %v477 = vpop.permute.xlu0 %476
    %v479 = vlaneseq
    %v480 = vshrl.u32 %v479, 7
    %v481 = vsub.s32 0, %v480
    %v482 = vrot.slane %v477, %v481
    %vm483 = vcmask 261120
    %v485 = vsel %vm483, %v472, 0
    %487 = vmatprep.subr.mxu0 %v445
    %488 = vmatpush1.msra.mxu0 %v444
    %489 = vmatprep.subr.mxu0 %v452
    %490 = vmatpush1.msra.mxu0 %v451
    %491 = vmatprep.subr.mxu0 %v459
    %492 = vmatpush1.msra.mxu0 %v458
    %493 = vmatprep.subr.mxu0 %v466
    %494 = vmatpush1.msra.mxu0 %v465
    %495 = vmatprep.subr.mxu0 0.0
    %496 = vmatpush1.msra.mxu0 0.0
    %497 = vmatprep.subr.mxu0 0.0
    %498 = vmatpush1.msra.mxu0 0.0
    %499 = vmatprep.subr.mxu0 0.0
    %500 = vmatpush1.msra.mxu0 0.0
    %501 = vmatprep.subr.mxu0 0.0
    %502 = vmatpush1.msra.mxu0 0.0
    %503 = vmatprep.subr.mxu0 0.0
    %504 = vmatpush1.msra.mxu0 0.0
    %505 = vmatprep.subr.mxu0 0.0
    %506 = vmatpush1.msra.mxu0 0.0
    %507 = vmatprep.subr.mxu0 0.0
    %508 = vmatpush1.msra.mxu0 0.0
    %509 = vmatprep.subr.mxu0 0.0
    %510 = vmatpush1.msra.mxu0 0.0
    %511 = vmatprep.subr.mxu0 0.0
    %512 = vmatpush1.msra.mxu0 0.0
    %513 = vmatprep.subr.mxu0 0.0
    %514 = vmatpush1.msra.mxu0 0.0
    %515 = vmatprep.subr.mxu0 0.0
    %516 = vmatpush1.msra.mxu0 0.0
    %517 = vmatprep.subr.mxu0 0.0
    %518 = vmatpush1.msra.mxu0 0.0
    %519 = vmatprep.subr.mxu0 0.0
    %520 = vmatpush1.msra.mxu0 0.0
    %521 = vmatprep.subr.mxu0 0.0
    %522 = vmatpush1.msra.mxu0 0.0
    %523 = vmatprep.subr.mxu0 0.0
    %524 = vmatpush1.msra.mxu0 0.0
    %525 = vmatprep.subr.mxu0 0.0
    %526 = vmatpush1.msra.mxu0 0.0
    %527 = vmatprep.subr.mxu0 0.0
    %528 = vmatpush1.msra.mxu0 0.0
    %529 = vmatprep.subr.mxu0 0.0
    %530 = vmatpush1.msra.mxu0 0.0
    %531 = vmatprep.subr.mxu0 0.0
    %532 = vmatpush1.msra.mxu0 0.0
    %533 = vmatprep.subr.mxu0 0.0
    %534 = vmatpush1.msra.mxu0 0.0
    %535 = vmatprep.subr.mxu0 0.0
    %536 = vmatpush1.msra.mxu0 0.0
    %537 = vmatprep.subr.mxu0 0.0
    %538 = vmatpush1.msra.mxu0 0.0
    %539 = vmatprep.subr.mxu0 0.0
    %540 = vmatpush1.msra.mxu0 0.0
    %541 = vmatprep.subr.mxu0 0.0
    %542 = vmatpush1.msra.mxu0 0.0
    %543 = vmatprep.subr.mxu0 0.0
    %544 = vmatpush1.msra.mxu0 0.0
    %545 = vmatprep.subr.mxu0 0.0
    %546 = vmatpush1.msra.mxu0 0.0
    %547 = vmatprep.subr.mxu0 0.0
    %548 = vmatpush1.msra.mxu0 0.0
    %549 = vmatprep.subr.mxu0 0.0
    %550 = vmatpush1.msra.mxu0 0.0
    %551 = vmatprep.mubr.f32.mxu0 0.0
    %552 = vmatmul.mubr.f32.gmra.mrb[0].mxu0 %v485
    %v553 = vpop.f32.mrb[0].mxu0
    %v554 = vadd.f32 %v482, %v553
    %v555 = vpop.f32.mrb[0].mxu0
    %v556 = vadd.f32 %v482, %v555
    %557 = vdwg.mxu0
    %558 = vmatprep.subr.mxu0 %v447
    %559 = vmatpush1.msra.mxu0 %v446
    %560 = vmatprep.subr.mxu0 %v454
    %561 = vmatpush1.msra.mxu0 %v453
    %562 = vmatprep.subr.mxu0 %v461
    %563 = vmatpush1.msra.mxu0 %v460
    %564 = vmatprep.subr.mxu0 %v468
    %565 = vmatpush1.msra.mxu0 %v467
    %566 = vmatprep.subr.mxu0 0.0
    %567 = vmatpush1.msra.mxu0 0.0
    %568 = vmatprep.subr.mxu0 0.0
    %569 = vmatpush1.msra.mxu0 0.0
    %570 = vmatprep.subr.mxu0 0.0
    %571 = vmatpush1.msra.mxu0 0.0
    %572 = vmatprep.subr.mxu0 0.0
    %573 = vmatpush1.msra.mxu0 0.0
    %574 = vmatprep.subr.mxu0 0.0
    %575 = vmatpush1.msra.mxu0 0.0
    %576 = vmatprep.subr.mxu0 0.0
    %577 = vmatpush1.msra.mxu0 0.0
    %578 = vmatprep.subr.mxu0 0.0
    %579 = vmatpush1.msra.mxu0 0.0
    %580 = vmatprep.subr.mxu0 0.0
    %581 = vmatpush1.msra.mxu0 0.0
    %582 = vmatprep.subr.mxu0 0.0
    %583 = vmatpush1.msra.mxu0 0.0
    %584 = vmatprep.subr.mxu0 0.0
    %585 = vmatpush1.msra.mxu0 0.0
    %586 = vmatprep.subr.mxu0 0.0
    %587 = vmatpush1.msra.mxu0 0.0
    %588 = vmatprep.subr.mxu0 0.0
    %589 = vmatpush1.msra.mxu0 0.0
    %590 = vmatprep.subr.mxu0 0.0
    %591 = vmatpush1.msra.mxu0 0.0
    %592 = vmatprep.subr.mxu0 0.0
    %593 = vmatpush1.msra.mxu0 0.0
    %594 = vmatprep.subr.mxu0 0.0
    %595 = vmatpush1.msra.mxu0 0.0
    %596 = vmatprep.subr.mxu0 0.0
    %597 = vmatpush1.msra.mxu0 0.0
    %598 = vmatprep.subr.mxu0 0.0
    %599 = vmatpush1.msra.mxu0 0.0
    %600 = vmatprep.subr.mxu0 0.0
    %601 = vmatpush1.msra.mxu0 0.0
    %602 = vmatprep.subr.mxu0 0.0
    %603 = vmatpush1.msra.mxu0 0.0
    %604 = vmatprep.subr.mxu0 0.0
    %605 = vmatpush1.msra.mxu0 0.0
    %606 = vmatprep.subr.mxu0 0.0
    %607 = vmatpush1.msra.mxu0 0.0
    %608 = vmatprep.subr.mxu0 0.0
    %609 = vmatpush1.msra.mxu0 0.0
    %610 = vmatprep.subr.mxu0 0.0
    %611 = vmatpush1.msra.mxu0 0.0
    %612 = vmatprep.subr.mxu0 0.0
    %613 = vmatpush1.msra.mxu0 0.0
    %614 = vmatprep.subr.mxu0 0.0
    %615 = vmatpush1.msra.mxu0 0.0
    %616 = vmatprep.subr.mxu0 0.0
    %617 = vmatpush1.msra.mxu0 0.0
    %618 = vmatprep.subr.mxu0 0.0
    %619 = vmatpush1.msra.mxu0 0.0
    %620 = vmatprep.subr.mxu0 0.0
    %621 = vmatpush1.msra.mxu0 0.0
    %622 = vmatprep.mubr.f32.mxu0 0.0
    %623 = vmatmul.mubr.f32.gmra.mrb[0].mxu0 %v485
    %v624 = vpop.f32.mrb[0].mxu0
    %v625 = vadd.f32 %v482, %v624
    %v626 = vpop.f32.mrb[0].mxu0
    %v627 = vadd.f32 %v482, %v626
    %628 = vdwg.mxu0
    %629 = vmatprep.subr.mxu0 %v449
    %630 = vmatpush1.msra.mxu0 %v448
    %631 = vmatprep.subr.mxu0 %v456
    %632 = vmatpush1.msra.mxu0 %v455
    %633 = vmatprep.subr.mxu0 %v463
    %634 = vmatpush1.msra.mxu0 %v462
    %635 = vmatprep.subr.mxu0 %v470
    %636 = vmatpush1.msra.mxu0 %v469
    %637 = vmatprep.subr.mxu0 0.0
    %638 = vmatpush1.msra.mxu0 0.0
    %639 = vmatprep.subr.mxu0 0.0
    %640 = vmatpush1.msra.mxu0 0.0
    %641 = vmatprep.subr.mxu0 0.0
    %642 = vmatpush1.msra.mxu0 0.0
    %643 = vmatprep.subr.mxu0 0.0
    %644 = vmatpush1.msra.mxu0 0.0
    %645 = vmatprep.subr.mxu0 0.0
    %646 = vmatpush1.msra.mxu0 0.0
    %647 = vmatprep.subr.mxu0 0.0
    %648 = vmatpush1.msra.mxu0 0.0
    %649 = vmatprep.subr.mxu0 0.0
    %650 = vmatpush1.msra.mxu0 0.0
    %651 = vmatprep.subr.mxu0 0.0
    %652 = vmatpush1.msra.mxu0 0.0
    %653 = vmatprep.subr.mxu0 0.0
    %654 = vmatpush1.msra.mxu0 0.0
    %655 = vmatprep.subr.mxu0 0.0
    %656 = vmatpush1.msra.mxu0 0.0
    %657 = vmatprep.subr.mxu0 0.0
    %658 = vmatpush1.msra.mxu0 0.0
    %659 = vmatprep.subr.mxu0 0.0
    %660 = vmatpush1.msra.mxu0 0.0
    %661 = vmatprep.subr.mxu0 0.0
    %662 = vmatpush1.msra.mxu0 0.0
    %663 = vmatprep.subr.mxu0 0.0
    %664 = vmatpush1.msra.mxu0 0.0
    %665 = vmatprep.subr.mxu0 0.0
    %666 = vmatpush1.msra.mxu0 0.0
    %667 = vmatprep.subr.mxu0 0.0
    %668 = vmatpush1.msra.mxu0 0.0
    %669 = vmatprep.subr.mxu0 0.0
    %670 = vmatpush1.msra.mxu0 0.0
    %671 = vmatprep.subr.mxu0 0.0
    %672 = vmatpush1.msra.mxu0 0.0
    %673 = vmatprep.subr.mxu0 0.0
    %674 = vmatpush1.msra.mxu0 0.0
    %675 = vmatprep.subr.mxu0 0.0
    %676 = vmatpush1.msra.mxu0 0.0
    %677 = vmatprep.subr.mxu0 0.0
    %678 = vmatpush1.msra.mxu0 0.0
    %679 = vmatprep.subr.mxu0 0.0
    %680 = vmatpush1.msra.mxu0 0.0
    %681 = vmatprep.subr.mxu0 0.0
    %682 = vmatpush1.msra.mxu0 0.0
    %683 = vmatprep.subr.mxu0 0.0
    %684 = vmatpush1.msra.mxu0 0.0
    %685 = vmatprep.subr.mxu0 0.0
    %686 = vmatpush1.msra.mxu0 0.0
    %687 = vmatprep.subr.mxu0 0.0
    %688 = vmatpush1.msra.mxu0 0.0
    %689 = vmatprep.subr.mxu0 0.0
    %690 = vmatpush1.msra.mxu0 0.0
    %691 = vmatprep.subr.mxu0 0.0
    %692 = vmatpush1.msra.mxu0 0.0
    %693 = vmatprep.mubr.f32.mxu0 0.0
    %694 = vmatmul.mubr.f32.gmra.mrb[0].mxu0 %v485
    %v695 = vpop.f32.mrb[0].mxu0
    %v696 = vadd.f32 %v482, %v695
    %v697 = vpop.f32.mrb[0].mxu0
    %v698 = vadd.f32 %v482, %v697
    %699 = vdwg.mxu0
    %700 = vmatprep.subr.mxu0 0.0
    %701 = vmatpush1.msra.mxu0 %v450
    %702 = vmatprep.subr.mxu0 0.0
    %703 = vmatpush1.msra.mxu0 %v457
    %704 = vmatprep.subr.mxu0 0.0
    %705 = vmatpush1.msra.mxu0 %v464
    %706 = vmatprep.subr.mxu0 0.0
    %707 = vmatpush1.msra.mxu0 %v471
    %708 = vmatprep.subr.mxu0 0.0
    %709 = vmatpush1.msra.mxu0 0.0
    %710 = vmatprep.subr.mxu0 0.0
    %711 = vmatpush1.msra.mxu0 0.0
    %712 = vmatprep.subr.mxu0 0.0
    %713 = vmatpush1.msra.mxu0 0.0
    %714 = vmatprep.subr.mxu0 0.0
    %715 = vmatpush1.msra.mxu0 0.0
    %716 = vmatprep.subr.mxu0 0.0
    %717 = vmatpush1.msra.mxu0 0.0
    %718 = vmatprep.subr.mxu0 0.0
    %719 = vmatpush1.msra.mxu0 0.0
    %720 = vmatprep.subr.mxu0 0.0
    %721 = vmatpush1.msra.mxu0 0.0
    %722 = vmatprep.subr.mxu0 0.0
    %723 = vmatpush1.msra.mxu0 0.0
    %724 = vmatprep.subr.mxu0 0.0
    %725 = vmatpush1.msra.mxu0 0.0
    %726 = vmatprep.subr.mxu0 0.0
    %727 = vmatpush1.msra.mxu0 0.0
    %728 = vmatprep.subr.mxu0 0.0
    %729 = vmatpush1.msra.mxu0 0.0
    %730 = vmatprep.subr.mxu0 0.0
    %731 = vmatpush1.msra.mxu0 0.0
    %732 = vmatprep.subr.mxu0 0.0
    %733 = vmatpush1.msra.mxu0 0.0
    %734 = vmatprep.subr.mxu0 0.0
    %735 = vmatpush1.msra.mxu0 0.0
    %736 = vmatprep.subr.mxu0 0.0
    %737 = vmatpush1.msra.mxu0 0.0
    %738 = vmatprep.subr.mxu0 0.0
    %739 = vmatpush1.msra.mxu0 0.0
    %740 = vmatprep.subr.mxu0 0.0
    %741 = vmatpush1.msra.mxu0 0.0
    %742 = vmatprep.subr.mxu0 0.0
    %743 = vmatpush1.msra.mxu0 0.0
    %744 = vmatprep.subr.mxu0 0.0
    %745 = vmatpush1.msra.mxu0 0.0
    %746 = vmatprep.subr.mxu0 0.0
    %747 = vmatpush1.msra.mxu0 0.0
    %748 = vmatprep.subr.mxu0 0.0
    %749 = vmatpush1.msra.mxu0 0.0
    %750 = vmatprep.subr.mxu0 0.0
    %751 = vmatpush1.msra.mxu0 0.0
    %752 = vmatprep.subr.mxu0 0.0
    %753 = vmatpush1.msra.mxu0 0.0
    %754 = vmatprep.subr.mxu0 0.0
    %755 = vmatpush1.msra.mxu0 0.0
    %756 = vmatprep.subr.mxu0 0.0
    %757 = vmatpush1.msra.mxu0 0.0
    %758 = vmatprep.subr.mxu0 0.0
    %759 = vmatpush1.msra.mxu0 0.0
    %760 = vmatprep.subr.mxu0 0.0
    %761 = vmatpush1.msra.mxu0 0.0
    %762 = vmatprep.subr.mxu0 0.0
    %763 = vmatpush1.msra.mxu0 0.0
    %764 = vmatprep.mubr.f32.mxu0 0.0
    %765 = vmatmul.mubr.f32.gmra.mrb[0].mxu0 %v485
    %v766 = vpop.f32.mrb[0].mxu0
    %v767 = vadd.f32 %v482, %v766
    %v768 = vpop.f32.mrb[0].mxu0
    %769 = vdwg.mxu0
    %v770 = vmax.f32 %v554, 0.0
    %v771 = vmax.f32 %v556, 0.0
    %v772 = vmax.f32 %v625, 0.0
    %v773 = vmax.f32 %v627, 0.0
    %v774 = vmax.f32 %v696, 0.0
    %v775 = vmax.f32 %v698, 0.0
    %v776 = vmax.f32 %v767, 0.0
    %v784 = vcombine.low %v770, %v771
    %v785 = vcombine.low %v772, %v773
    %v786 = vcombine.low %v774, %v775
    %v788 = vunpack.c.l.s4 1966171168
    %v789 = vunpack.c.0.s8 %v788
    %v790 = vlaneseq
    %v791 = vshrl.u32 %v790, 7
    %v792 = vsub.s32 %v789, %v791
    %v793 = vrot.slane %v784, %v792
    %v795 = vunpack.c.l.s4 1966171168
    %v796 = vunpack.c.0.s8 %v795
    %v797 = vlaneseq
    %v798 = vshrl.u32 %v797, 7
    %v799 = vsub.s32 %v796, %v798
    %v800 = vrot.slane %v785, %v799
    %v802 = vunpack.c.l.s4 1966171168
    %v803 = vunpack.c.0.s8 %v802
    %v804 = vlaneseq
    %v805 = vshrl.u32 %v804, 7
    %v806 = vsub.s32 %v803, %v805
    %v807 = vrot.slane %v786, %v806
    %v809 = vunpack.c.l.s4 1966171168
    %v810 = vunpack.c.0.s8 %v809
    %v811 = vlaneseq
    %v812 = vshrl.u32 %v811, 7
    %v813 = vsub.s32 %v810, %v812
    %v814 = vrot.slane %v776, %v813
    %v815 = vcombine.low %v793, %v800
    %v816 = vcombine.low %v807, %v814
    %v818 = vunpack.c.l.s4 1966171168
    %v819 = vunpack.c.0.s8 %v818
    %v820 = vlaneseq
    %v821 = vshrl.u32 %v820, 7
    %v822 = vsub.s32 %v819, %v821
    %v823 = vrot.slane %v815, %v822
    %v825 = vunpack.c.l.s4 1966171168
    %v826 = vunpack.c.0.s8 %v825
    %v827 = vlaneseq
    %v828 = vshrl.u32 %v827, 7
    %v829 = vsub.s32 %v826, %v828
    %v830 = vrot.slane %v816, %v829
    %v831 = vcombine.low %v823, %v830
    %v833 = vlaneseq
    %vm834 = vcmp.ge.s32.totalorder %v833, 0
    %vm835 = vcmp.lt.s32.totalorder %v833, 896
    %vm836 = vmand %vm834, %vm835
    %837 = vst.msk [vmem:[#allocation6] sm:$0x7f] %vm836, %v831
    // Predicated region
    $region26: #{tpu_custom_call.1} parent=1 // pred_check
      _
    $region27: #{tpu_custom_call.1} parent=1 // pred_check_branch
      %839 = sbr.rel (0) target = $region29
    $region28: #{tpu_custom_call.1} parent=1 // pred_region
      %s841 = ssub.s32 112, 112
      %842 = vsyncadd [#allocation5], %s841
      %s844 = sshll.u32 [#allocation6], 4
      %s845 = int_to_ptr.vmem [resolvable:$true] %s844
      %847 = dma.vmem_to_hbm [thread:$0]  %s845, 112, %s5, [#allocation5]
    $region29: #{tpu_custom_call.1} parent=1 // pred_fallthru
      _
    // Predicated region
    $region30: #{tpu_custom_call.1} parent=1 // pred_check
      _
    $region31: #{tpu_custom_call.1} parent=1 // pred_check_branch
      %849 = sbr.rel (0) target = $region33
    $region32: #{tpu_custom_call.1} parent=1 // pred_region
      %850 = dma.done [#allocation5], 112
    $region33: #{tpu_custom_call.1} parent=1 // pred_fallthru
      _
    %851 = vsyncpa [#allocation4], 1
    %852 = vsyncpa [#allocation5], 1

</llo_original>
